<compile_context>
chip_gen: v7x
topology: tpu7x:2x2x1
jax: 0.10.0
libtpu: 0.0.40
codegen_flags: <defaults>
</compile_context>

<pallas_src>
import functools

import jax
import jax.numpy as jnp
from jax.experimental import pallas as pl
from jax.experimental.pallas import tpu as pltpu

_LANE = 128
_WALIGN = 16            # width alignment for the shifted-window conv path
_ACT_BUDGET = 4 << 20   # target bytes for the in-kernel/row im2col tile
_VMEM_CAP = 48 << 20    # stay well inside v7x's 64 MiB / TensorCore


def _round_up(x, m):
    return (x + m - 1) // m * m


def _largest_divisor_leq(n, cap, mult=1):
    """Largest d <= cap with d % mult == 0 and n % d == 0 (requires n % mult == 0)."""
    cap = max(mult, min(n, cap))
    cap -= cap % mult
    for d in range(cap, 0, -mult):
        if n % d == 0:
            return d
    return mult


# ---------------------------------------------------------------------------
# Pallas kernels
# ---------------------------------------------------------------------------
def _conv3x3_kernel(x_ref, w_ref, b_ref, o_ref, *, tr, wk, w_real, relu):
    """3x3 conv row-tile: in-kernel 9-tap im2col (K = 9*Cin) + ONE MXU matmul.

    x_ref : (1, tb, tr+2, Wpk, Cin)  padded activation rows (halo included)
    w_ref : (9*Cin, tco) bf16        tap-major (ky*3+kx) then channel
    b_ref : (1, tco)   f32
    o_ref : (tb, tr, W, tco)
    """
    rows = x_ref[0]                                    # (tb, tr+2, Wpk, Cin)
    tb = rows.shape[0]
    m = tb * tr * wk
    # dy slices are outer-dim views; dx folds into the lane-dim concatenation
    # (every piece is a multiple of 128 lanes wide -> aligned destination).
    taps = [rows[:, dy:dy + tr, dx:dx + wk, :]
            for dy in range(3) for dx in range(3)]
    cat = jnp.concatenate(taps, axis=-1)               # (tb, tr, wk, 9*Cin)
    res = jnp.dot(cat.reshape(m, cat.shape[-1]), w_ref[...],
                  preferred_element_type=jnp.float32)
    res = res + b_ref[...]
    if relu:
        res = jnp.maximum(res, 0.0)
    res = res.reshape(tb, tr, wk, -1)[:, :, :w_real, :]
    o_ref[...] = res.astype(o_ref.dtype)


def _matmul_bias_kernel(a_ref, w_ref, b_ref, o_ref, *, relu):
    """(tm, K) @ (K, tco) + bias [+ ReLU]; K is never tiled -> no accumulator."""
    res = jnp.dot(a_ref[...], w_ref[...], preferred_element_type=jnp.float32)
    res = res + b_ref[...]
    if relu:
        res = jnp.maximum(res, 0.0)
    o_ref[...] = res.astype(o_ref.dtype)


def _maxpool_kernel(x_ref, o_ref, *, trp):
    # x_ref: (1, 2*trp, Wo, 2*C) -- wrapper reshaped (W, C) -> (Wo, 2C) for free.
    c = o_ref.shape[-1]
    x = x_ref[0]
    h = jnp.maximum(x[:, :, :c], x[:, :, c:])          # horizontal 2:1 (lane aligned)
    h = h.reshape(trp, 2, h.shape[1], c)               # outer-dim row split
    o_ref[0] = jnp.maximum(h[:, 0], h[:, 1])           # vertical 2:1


# ---------------------------------------------------------------------------
# Conv wrappers
# ---------------------------------------------------------------------------
def _pick_tco(cout_p, other_steps):
    # 256-wide tiles fill the v6e/v7x MXU; fall back to 128 when the grid would
    # otherwise be too small to pipeline / shard across v7x's 2 TensorCores.
    # (v5e may also prefer 128; weight HBM traffic is unchanged either way.)
    tco = 256 if cout_p % 256 == 0 else _LANE
    if tco > _LANE and (cout_p // tco) * other_steps < 4:
        tco = _LANE
    return tco, cout_p // tco


def _conv_shifted3x3(x, w_packed, b_packed, relu, out_dtype):
    """3x3 pad-1 conv: raw NHWC activation streamed once from HBM, 9-tap
    im2col in VMEM, single (M, 9*Cin) x (9*Cin, tco) matmul per grid step."""
    N, H, W, Cact = x.shape
    Kp, cout_p = w_packed.shape
    assert Kp == 9 * Cact and Cact % _LANE == 0

    Wk = _round_up(W, _WALIGN)
    Wpk = Wk + 2
    # Cap M so the in-VMEM im2col tile (m * 9*Cin * bf16) stays <= ~4 MiB.
    m_cap = max(Wk, min(2048, _ACT_BUDGET // (9 * Cact * 2)))
    if H * Wk >= m_cap:
        tr = _largest_divisor_leq(H, max(1, m_cap // Wk))
        tb = 1
    else:
        tr = H
        tb = _largest_divisor_leq(N, max(1, m_cap // (H * Wk)))
    n_h = H // tr
    n_b = N // tb
    m = tb * tr * Wk

    tco, n_co = _pick_tco(cout_p, n_b * n_h)

    xpad = jnp.pad(x.astype(jnp.bfloat16),
                   ((0, 0), (1, 1), (1, Wk - W + 1), (0, 0)))
    if n_h == 1:
        xtiles = xpad[None]                            # (1, N, H+2, Wpk, C)
    else:
        # Duplicate the two halo rows per row-tile once in HBM so a single
        # BlockSpec of tr+2 rows suffices (no per-step halo concatenate).
        xtiles = jnp.stack(
            [xpad[:, i * tr:i * tr + tr + 2] for i in range(n_h)], axis=0)

    out_isz = jnp.dtype(out_dtype).itemsize
    est = (2 * (tb * (tr + 2) * Wpk * Cact * 2        # activation tile (x2 buf)
                + Kp * tco * 2                        # weight tile
                + tco * 4                             # bias
                + tb * tr * W * tco * out_isz)        # output tile
           + m * Kp * 2                               # in-kernel im2col tile
           + m * tco * 4)                             # f32 matmul result
    vmem_limit = int(min(max(est + est // 4 + (2 << 20), 20 << 20), _VMEM_CAP))

    return pl.pallas_call(
        functools.partial(_conv3x3_kernel, tr=tr, wk=Wk, w_real=W, relu=relu),
        out_shape=jax.ShapeDtypeStruct((N, H, W, cout_p), out_dtype),
        grid_spec=pltpu.PrefetchScalarGridSpec(
            num_scalar_prefetch=0,
            grid=(n_co, n_b, n_h),
            in_specs=[pl.BlockSpec((1, tb, tr + 2, Wpk, Cact),
                                   lambda co, b, mi: (mi, b, 0, 0, 0)),
                      pl.BlockSpec((Kp, tco), lambda co, b, mi: (0, co)),
                      pl.BlockSpec((1, tco), lambda co, b, mi: (0, co))],
            out_specs=pl.BlockSpec((tb, tr, W, tco),
                                   lambda co, b, mi: (b, mi, 0, co))),
        compiler_params=pltpu.CompilerParams(
            dimension_semantics=("parallel", "parallel", "parallel"),
            vmem_limit_bytes=vmem_limit),
    )(xtiles, w_packed, b_packed)


def _conv_im2col(x, w_packed, b_packed, k, relu, out_dtype):
    """Conv as a plain matmul on JAX-side im2col patches.  Used for the
    3-channel stem, all 1x1 convs and small-spatial (W < 16) layers so no
    width padding / MXU zero rows are wasted (M = N*H*W, padded to 16)."""
    N, H, W, Cact = x.shape
    Kp, cout_p = w_packed.shape
    if k == 3:
        xp = jnp.pad(x, ((0, 0), (1, 1), (1, 1), (0, 0)))
        patches = jnp.concatenate(
            [xp[:, dy:dy + H, dx:dx + W, :]
             for dy in range(3) for dx in range(3)], axis=-1)
    else:
        patches = x
    K_raw = k * k * Cact
    assert Kp >= K_raw
    M = N * H * W
    M_pad = _round_up(M, 16)

    tm_cap = max(16, min(512, _ACT_BUDGET // (Kp * 2)))
    tm = M_pad if M_pad <= tm_cap else _largest_divisor_leq(M_pad, tm_cap, 16)
    n_m = M_pad // tm
    tco, n_co = _pick_tco(cout_p, n_m)

    a = patches.reshape(M, K_raw)
    a = jnp.pad(a, ((0, M_pad - M), (0, Kp - K_raw))).astype(jnp.bfloat16)

    out_isz = jnp.dtype(out_dtype).itemsize
    est = (2 * (tm * Kp * 2 + Kp * tco * 2 + tco * 4 + tm * tco * out_isz)
           + tm * tco * 4)
    vmem_limit = int(min(max(est + est // 4 + (2 << 20), 20 << 20), _VMEM_CAP))

    out = pl.pallas_call(
        functools.partial(_matmul_bias_kernel, relu=relu),
        out_shape=jax.ShapeDtypeStruct((M_pad, cout_p), out_dtype),
        grid_spec=pltpu.PrefetchScalarGridSpec(
            num_scalar_prefetch=0,
            grid=(n_co, n_m),
            in_specs=[pl.BlockSpec((tm, Kp), lambda co, mi: (mi, 0)),
                      pl.BlockSpec((Kp, tco), lambda co, mi: (0, co)),
                      pl.BlockSpec((1, tco), lambda co, mi: (0, co))],
            out_specs=pl.BlockSpec((tm, tco), lambda co, mi: (mi, co))),
        compiler_params=pltpu.CompilerParams(
            dimension_semantics=("parallel", "parallel"),
            vmem_limit_bytes=vmem_limit),
    )(a, w_packed, b_packed)
    return out[:M].reshape(N, H, W, cout_p)


def conv2d_nhwc(x, w_packed, b_packed, k, relu, out_dtype=jnp.bfloat16):
    """Conv2d(k, stride=1, padding=(k-1)//2) [+ ReLU] on (channel-padded) NHWC."""
    _, _, W, Cact = x.shape
    if k == 3 and W >= _WALIGN and Cact % _LANE == 0:
        return _conv_shifted3x3(x, w_packed, b_packed, relu, out_dtype)
    return _conv_im2col(x, w_packed, b_packed, k, relu, out_dtype)


def maxpool2x2_nhwc(x):
    """MaxPool2d(kernel_size=2, stride=2) on NHWC, single read of the input."""
    N, H, W, C = x.shape
    assert H % 2 == 0 and W % 2 == 0 and C % _LANE == 0
    Ho, Wo = H // 2, W // 2
    xr = x.reshape(N, H, Wo, 2 * C)   # free HBM reshape: horiz pair -> lanes
    bytes_per_row_pair = 2 * Wo * 2 * C * x.dtype.itemsize
    trp = _largest_divisor_leq(Ho, max(1, (4 << 20) // max(1, bytes_per_row_pair)))
    n_hp = Ho // trp
    in_bytes = 2 * trp * Wo * 2 * C * x.dtype.itemsize
    vmem_limit = int(min(max(3 * in_bytes + (2 << 20), 16 << 20), _VMEM_CAP))
    return pl.pallas_call(
        functools.partial(_maxpool_kernel, trp=trp),
        out_shape=jax.ShapeDtypeStruct((N, Ho, Wo, C), x.dtype),
        grid_spec=pltpu.PrefetchScalarGridSpec(
            num_scalar_prefetch=0,
            grid=(N, n_hp),
            in_specs=[pl.BlockSpec((1, 2 * trp, Wo, 2 * C),
                                   lambda b, i: (b, i, 0, 0))],
            out_specs=pl.BlockSpec((1, trp, Wo, C),
                                   lambda b, i: (b, i, 0, 0))),
        compiler_params=pltpu.CompilerParams(
            dimension_semantics=("parallel", "parallel"),
            vmem_limit_bytes=vmem_limit),
    )(xr)


# ---------------------------------------------------------------------------
# Parameters (mirror _initialize_weights) + one-time packing
# ---------------------------------------------------------------------------
def _xavier_uniform(key, cout, cin, k):
    fan_in = cin * k * k
    fan_out = cout * k * k
    limit = (6.0 / (fan_in + fan_out)) ** 0.5
    return jax.random.uniform(key, (cout, cin, k, k), jnp.float32, -limit, limit)


def make_vgg_params(key, num_classes):
    """VGG16 'D' features (cnvs=(10,17,24)); the trailing pool is self.fmp and
    is never applied in forward().  Then the cls head."""
    cfg = [64, 64, 'M', 128, 128, 'M', 256, 256, 256, 'M',
           512, 512, 512, 'M', 512, 512, 512]
    layers = []
    cin = 3
    for v in cfg:
        if v == 'M':
            layers.append(('pool',))
        else:
            key, sub = jax.random.split(key)
            layers.append(('conv', _xavier_uniform(sub, v, cin, 3),
                           jnp.zeros((v,), jnp.float32), 3, True))
            cin = v
    # cls = Conv(512,1024,3,p1)+ReLU, Conv(1024,1024,3,p1)+ReLU, Conv(1024,NC,1)
    head = [(512, 1024, 3, True), (1024, 1024, 3, True),
            (1024, num_classes, 1, False)]
    for ci, co, k, relu in head:
        key, sub = jax.random.split(key)
        layers.append(('conv', _xavier_uniform(sub, co, ci, k),
                       jnp.zeros((co,), jnp.float32), k, relu))
    return layers


def pack_vgg_params(layers):
    """One-time weight prep: (Cout,Cin,K,K) f32 -> (K*K*Cin_pad, Cout_pad) bf16
    (tap-major K order, shared by both conv paths) and bias -> (1, Cout_pad)
    f32.  Channel padding is carried layer to layer so activations stay
    128-lane aligned; padded channels get zero weights/bias and stay zero."""
    packed = []
    cin_pad = 3
    for layer in layers:
        if layer[0] == 'pool':
            packed.append(('pool',))
            continue
        _, w, b, k, relu = layer
        cout, cin = int(w.shape[0]), int(w.shape[1])
        cout_p = _round_up(cout, _LANE)
        w_t = jnp.transpose(w, (2, 3, 1, 0))                 # (ky, kx, cin, cout)
        w_t = jnp.pad(w_t, ((0, 0), (0, 0),
                            (0, cin_pad - cin), (0, cout_p - cout)))
        w_t = w_t.reshape(k * k * cin_pad, cout_p)
        kp = _round_up(w_t.shape[0], 32)                     # stem: 27 -> 32
        w_t = jnp.pad(w_t, ((0, kp - w_t.shape[0]), (0, 0)))
        b_p = jnp.pad(b, (0, cout_p - cout)).astype(jnp.float32).reshape(1, cout_p)
        packed.append(('conv', w_t.astype(jnp.bfloat16), b_p, k, relu))
        cin_pad = cout_p
    return packed


# ---------------------------------------------------------------------------
# Forward pass + pure-JAX reference
# ---------------------------------------------------------------------------
def vgg_forward(x_nchw, packed_layers, num_classes):
    """forward(x): conv1_2 -> conv3 -> conv4 -> conv5 -> cls; returns cls_map."""
    x = jnp.transpose(x_nchw, (0, 2, 3, 1)).astype(jnp.bfloat16)  # NCHW -> NHWC
    conv_ids = [i for i, l in enumerate(packed_layers) if l[0] == 'conv']
    last = conv_ids[-1]
    for i, layer in enumerate(packed_layers):
        if layer[0] == 'pool':
            x = maxpool2x2_nhwc(x)
        else:
            _, w_p, b_p, k, relu = layer
            out_dtype = jnp.float32 if i == last else jnp.bfloat16
            x = conv2d_nhwc(x, w_p, b_p, k, relu, out_dtype)
    x = x[..., :num_classes]                      # drop lane padding of the head
    return jnp.transpose(x, (0, 3, 1, 2))         # NHWC -> NCHW


def vgg_reference(x_nchw, layers, num_classes):
    """Pure-JAX f32 reference with matched bf16 weight/activation rounding."""
    x = jnp.transpose(x_nchw, (0, 2, 3, 1))
    x = x.astype(jnp.bfloat16).astype(jnp.float32)
    conv_ids = [i for i, l in enumerate(layers) if l[0] == 'conv']
    last = conv_ids[-1]
    for i, layer in enumerate(layers):
        if layer[0] == 'pool':
            x = jax.lax.reduce_window(x, -jnp.inf, jax.lax.max,
                                      (1, 2, 2, 1), (1, 2, 2, 1), 'VALID')
            continue
        _, w, b, k, relu = layer
        wf = w.astype(jnp.bfloat16).astype(jnp.float32)
        pad = (k - 1) // 2
        x = jax.lax.conv_general_dilated(
            x, jnp.transpose(wf, (2, 3, 1, 0)), (1, 1),
            ((pad, pad), (pad, pad)),
            dimension_numbers=('NHWC', 'HWIO', 'NHWC'),
            precision=jax.lax.Precision.HIGHEST)
        x = x + b.reshape(1, 1, 1, -1)
        if relu:
            x = jnp.maximum(x, 0.0)
        if i != last:
            x = x.astype(jnp.bfloat16).astype(jnp.float32)
    return jnp.transpose(x, (0, 3, 1, 2))


# ---------------------------------------------------------------------------
if __name__ == "__main__":
    key = jax.random.PRNGKey(0)
    pkey, xkey = jax.random.split(key)

    num_classes = 10                      # small synthetic head (ctor arg)
    layers = make_vgg_params(pkey, num_classes)
    packed = pack_vgg_params(layers)      # one-time weight packing

    # Small NCHW input, like PyTorch: (N=2, C=3, H=32, W=32)
    x = jax.random.normal(xkey, (2, 3, 32, 32), jnp.float32)

    cls_map = vgg_forward(x, packed, num_classes)
    cls_map = jax.block_until_ready(cls_map)

    # 32 -> (4 pools) -> 2 spatial; cls head keeps spatial size.
    assert cls_map.shape == (2, num_classes, 2, 2), cls_map.shape
    assert bool(jnp.isfinite(cls_map).all())

    # Numerical check against a pure-JAX reference with matched bf16 rounding.
    ref = vgg_reference(x, layers, num_classes)
    err = float(jnp.max(jnp.abs(cls_map - ref)))
    scale = float(jnp.max(jnp.abs(ref))) + 1e-6
    assert err <= 3e-2 * scale + 1e-3, (err, scale)

    print("KERNEL_OK")
</pallas_src>

<mosaic_0001>
module attributes {stable_mosaic.version = 11 : i64} {
  func.func @_matmul_bias_kernel(%arg0: i32, %arg1: i32, %arg2: memref<512x32xbf16, #tpu.memory_space<vmem>>, %arg3: memref<32x128xbf16, #tpu.memory_space<vmem>>, %arg4: memref<1x128xf32, #tpu.memory_space<vmem>>, %arg5: memref<512x128xbf16, #tpu.memory_space<vmem>>) attributes {dimension_semantics = [#tpu.dimension_semantics<parallel>, #tpu.dimension_semantics<parallel>], iteration_bounds = array<i64: 1, 4>, scalar_prefetch = 0 : i64, scratch_operands = 0 : i64, tpu.core_type = #tpu.core_type<tc>, window_params = [{transform_indices = @transform_0, window_bounds = array<i64: 512, 32>}, {transform_indices = @transform_1, window_bounds = array<i64: 32, 128>}, {transform_indices = @transform_2, window_bounds = array<i64: 1, 128>}, {transform_indices = @transform_3, window_bounds = array<i64: 512, 128>}]} {
    %c0 = arith.constant 0 : index
    %c0_0 = arith.constant 0 : index
    %0 = vector.load %arg2[%c0, %c0_0] : memref<512x32xbf16, #tpu.memory_space<vmem>>, vector<512x32xbf16>
    %c0_1 = arith.constant 0 : index
    %c0_2 = arith.constant 0 : index
    %1 = vector.load %arg3[%c0_1, %c0_2] : memref<32x128xbf16, #tpu.memory_space<vmem>>, vector<32x128xbf16>
    %cst = arith.constant dense<0.000000e+00> : vector<512x128xf32>
    %2 = tpu.matmul %0, %1, %cst {dimension_numbers = #tpu.dot_dimension_numbers<[1], [0], [0], [1], [0, 0, 1, 1], [], []>} : vector<512x32xbf16>, vector<32x128xbf16>, vector<512x128xf32> -> vector<512x128xf32>
    %c0_3 = arith.constant 0 : index
    %c0_4 = arith.constant 0 : index
    %3 = vector.load %arg4[%c0_3, %c0_4] : memref<1x128xf32, #tpu.memory_space<vmem>>, vector<1x128xf32>
    %4 = vector.broadcast %3 : vector<1x128xf32> to vector<512x128xf32>
    %5 = arith.addf %2, %4 : vector<512x128xf32>
    %cst_5 = arith.constant 0.000000e+00 : f32
    %6 = vector.broadcast %cst_5 : f32 to vector<512x128xf32>
    %7 = arith.maximumf %5, %6 : vector<512x128xf32>
    %8 = arith.truncf %7 : vector<512x128xf32> to vector<512x128xbf16>
    %c0_6 = arith.constant 0 : index
    %c0_7 = arith.constant 0 : index
    %9 = vector.load %arg5[%c0_6, %c0_7] : memref<512x128xbf16, #tpu.memory_space<vmem>>, vector<512x128xbf16>
    tpu.vector_store %arg5[%c0_6, %c0_7], %8 {strides = array<i32>} : memref<512x128xbf16, #tpu.memory_space<vmem>>, vector<512x128xbf16>,
    return
  }
  func.func @transform_0(%arg0: i32, %arg1: i32) -> (i32, i32) {
    %c0_i32 = arith.constant 0 : i32
    %c0_i32_0 = arith.constant 0 : i32
    return %arg1, %c0_i32 : i32, i32
  }
  func.func @transform_1(%arg0: i32, %arg1: i32) -> (i32, i32) {
    %c0_i32 = arith.constant 0 : i32
    %c0_i32_0 = arith.constant 0 : i32
    return %c0_i32, %arg0 : i32, i32
  }
  func.func @transform_2(%arg0: i32, %arg1: i32) -> (i32, i32) {
    %c0_i32 = arith.constant 0 : i32
    %c0_i32_0 = arith.constant 0 : i32
    return %c0_i32, %arg0 : i32, i32
  }
  func.func @transform_3(%arg0: i32, %arg1: i32) -> (i32, i32) {
    %c0_i32 = arith.constant 0 : i32
    return %arg1, %arg0 : i32, i32
  }
}

</mosaic_0001>

<llo_original>
// kernel: tpu_custom_call.1
$region0: #{tpu_custom_call.1}
  #allocation0 [shape = 'u32[]', space=smem, size = 0x4, offset = 0x4, fixed_abs, tag = 'smem constant byte address 0x4 - core index']
  #allocation1 [shape = 'u32[144,128]{1,0:T(1,128)}', space=vmem, size = 0x12000, scoped, tag = 'internal scratch']
  %s0 = inlined_call_operand.vmem [shape: bf16[2048,32], index: 0, kind: input, shape index: {}]
  %s1 = inlined_call_operand.vmem [shape: bf16[32,128], index: 1, kind: input, shape index: {}]
  %s2 = inlined_call_operand.vmem [shape: f32[1,128], index: 2, kind: input, shape index: {}]
  %s3 = inlined_call_operand.hbm [shape: bf16[2048,128], index: 3, kind: output, shape index: {}]
  %s4 = sld [smem:[#allocation0]]
  $region45: #{tpu_custom_call.1} parent=0
    _
  %s6 = ssub.s32 1, %s4
  %s7 = scalar_select 0, %s6, %s4
  $region1: #{tpu_custom_call.1} parent=0
    #allocation2 [shape = 'u8[262144]{0}', space=vmem, size = 0x40000, scoped, tag = 'output window, operand 0']
    #allocation3 [shape = 's32[2]{0}', space=sflag, size = 0x8, scoped, tag = 'scoped memory for tpu_custom_call.1']
    %8 = vsyncpa [#allocation3], 0
    %s9 = scalar_lea.sflag [#allocation3], 1
    %10 = vsyncpa %s9, 0
    loop: start=0, step=1, limit=6
    $region2: #{tpu_custom_call.1} parent=1 // loop_pre_header
      _
    $region3: #{tpu_custom_call.1} parent=1 // loop_header
      %s12 = sphi 0, %s16
      %p13 = scmp.ge.s32.totalorder %s12, 6
      %s19 = sphi 0, %s31
      %s20 = sphi 0, %s27
      %s21 = sphi 0, %s19
      %s22 = sphi 0, %s20
      %s23 = sphi 0, %s21
      %s24 = sphi 0, %s22
      %s34 = sphi 0, %s36
      %s37 = sphi 0, %s34
      %s38 = sphi 0, %s37
      %s54 = sphi 0, %s38
      %s60 = sphi 0, %s62
      %s63 = sphi 0, %s60
      %s64 = sphi 0, %s63
      %s80 = sphi 0, %s64
      %s86 = sphi 0, %s88
      %s89 = sphi 0, %s86
      %s90 = sphi 0, %s89
      %s106 = sphi 0, %s90
      %s114 = sphi 0, %s116
      %s117 = sphi 0, %s114
      %s118 = sphi 0, %s117
      %s134 = sphi 0, %s118
    $region4: #{tpu_custom_call.1} parent=1 // loop_header_branch
      %15 = sbr.rel (%p13) target = $region8
    $region5: #{tpu_custom_call.1} parent=1 // loop_body
      %s17 = ssub.s32 %s12, 1
      %s18 = ssub.s32 %s12, 2
      %s25 = sadd.s32 1, %s20
      %p26 = scmp.ge.s32.totalorder %s25, 4
      %s27 = scalar_select %p26, 0, %s25
      %s28 = sadd.s32 1, %s19
      %s29 = scalar_select %p26, %s28, %s19
      %p30 = scmp.ge.s32.totalorder %s29, 1
      %s31 = scalar_select %p30, 0, %s29
      %s32 = ssub.s32 %s20, %s27
      %p33 = scmp.eq.s32.totalorder %s32, 0
      %s35 = sadd.s32 %s34, 1
      %s36 = scalar_select %p33, %s34, %s35
      %p39 = pneg %p33
      %p40 = scmp.eq.s32.totalorder %s12, 3
      %p41 = por %p39, %p40
      %p42 = scmp.ne.s32.totalorder %s34, %s37
      %p43 = scmp.eq.s32.totalorder %s12, 0
      %p44 = por %p42, %p43
      %p45 = scmp.ne.s32.totalorder %s34, %s37
      %p46 = scmp.eq.s32.totalorder %s17, 3
      %p47 = por %p45, %p46
      %p48 = scmp.ne.s32.totalorder %s37, %s38
      %p49 = scmp.eq.s32.totalorder %s17, 0
      %p50 = por %p48, %p49
      %p51 = scmp.ne.s32.totalorder %s37, %s38
      %p52 = scmp.eq.s32.totalorder %s18, 3
      %p53 = por %p51, %p52
      %p55 = scmp.ne.s32.totalorder %s38, %s54
      %p56 = scmp.eq.s32.totalorder %s18, 0
      %p57 = por %p55, %p56
      %s58 = ssub.s32 %s19, %s31
      %p59 = scmp.eq.s32.totalorder %s58, 0
      %s61 = sadd.s32 %s60, 1
      %s62 = scalar_select %p59, %s60, %s61
      %p65 = pneg %p59
      %p66 = scmp.eq.s32.totalorder %s12, 3
      %p67 = por %p65, %p66
      %p68 = scmp.ne.s32.totalorder %s60, %s63
      %p69 = scmp.eq.s32.totalorder %s12, 0
      %p70 = por %p68, %p69
      %p71 = scmp.ne.s32.totalorder %s60, %s63
      %p72 = scmp.eq.s32.totalorder %s17, 3
      %p73 = por %p71, %p72
      %p74 = scmp.ne.s32.totalorder %s63, %s64
      %p75 = scmp.eq.s32.totalorder %s17, 0
      %p76 = por %p74, %p75
      %p77 = scmp.ne.s32.totalorder %s63, %s64
      %p78 = scmp.eq.s32.totalorder %s18, 3
      %p79 = por %p77, %p78
      %p81 = scmp.ne.s32.totalorder %s64, %s80
      %p82 = scmp.eq.s32.totalorder %s18, 0
      %p83 = por %p81, %p82
      %s84 = ssub.s32 %s19, %s31
      %p85 = scmp.eq.s32.totalorder %s84, 0
      %s87 = sadd.s32 %s86, 1
      %s88 = scalar_select %p85, %s86, %s87
      %p91 = pneg %p85
      %p92 = scmp.eq.s32.totalorder %s12, 3
      %p93 = por %p91, %p92
      %p94 = scmp.ne.s32.totalorder %s86, %s89
      %p95 = scmp.eq.s32.totalorder %s12, 0
      %p96 = por %p94, %p95
      %p97 = scmp.ne.s32.totalorder %s86, %s89
      %p98 = scmp.eq.s32.totalorder %s17, 3
      %p99 = por %p97, %p98
      %p100 = scmp.ne.s32.totalorder %s89, %s90
      %p101 = scmp.eq.s32.totalorder %s17, 0
      %p102 = por %p100, %p101
      %p103 = scmp.ne.s32.totalorder %s89, %s90
      %p104 = scmp.eq.s32.totalorder %s18, 3
      %p105 = por %p103, %p104
      %p107 = scmp.ne.s32.totalorder %s90, %s106
      %p108 = scmp.eq.s32.totalorder %s18, 0
      %p109 = por %p107, %p108
      %s110 = ssub.s32 %s20, %s27
      %s111 = ssub.s32 %s19, %s31
      %s112 = sor.u32 %s110, %s111
      %p113 = scmp.eq.s32.totalorder %s112, 0
      %s115 = sadd.s32 %s114, 1
      %s116 = scalar_select %p113, %s114, %s115
      %p119 = pneg %p113
      %p120 = scmp.eq.s32.totalorder %s12, 3
      %p121 = por %p119, %p120
      %p122 = scmp.ne.s32.totalorder %s114, %s117
      %p123 = scmp.eq.s32.totalorder %s12, 0
      %p124 = por %p122, %p123
      %p125 = scmp.ne.s32.totalorder %s114, %s117
      %p126 = scmp.eq.s32.totalorder %s17, 3
      %p127 = por %p125, %p126
      %p128 = scmp.ne.s32.totalorder %s117, %s118
      %p129 = scmp.eq.s32.totalorder %s17, 0
      %p130 = por %p128, %p129
      %p131 = scmp.ne.s32.totalorder %s117, %s118
      %p132 = scmp.eq.s32.totalorder %s18, 3
      %p133 = por %p131, %p132
      %p135 = scmp.ne.s32.totalorder %s118, %s134
      %p136 = scmp.eq.s32.totalorder %s18, 0
      %p137 = por %p135, %p136
      %p138 = scmp.le.s32.totalorder 1, %s12
      %p139 = scmp.lt.s32.totalorder %s12, 5
      %p140 = pnand %p138, %p139
      %p141 = pneg %p140
      // Predicated region
      $region9: #{tpu_custom_call.1} parent=5 // pred_check
        _
      $region10: #{tpu_custom_call.1} parent=5 // pred_check_branch
        %143 = sbr.rel (%p140) target = $region12
      $region11: #{tpu_custom_call.1} parent=5 // pred_region
        %s144 = ssub.s32 %s12, 1
        // Predicated region
        $region13: #{tpu_custom_call.1} parent=11 // pred_check
          %p145 = pneg %p76
        $region14: #{tpu_custom_call.1} parent=11 // pred_check_branch
          %147 = sbr.rel (%p145) target = $region16
        $region15: #{tpu_custom_call.1} parent=11 // pred_region
          %p148 = scmp.lt.s32.totalorder %s21, 0
          %s149 = scalar_select %p148, %s21, 0
          %s150 = smul.addr %s149, 4
          %s151 = scalar_lea.vmem %s1, %s150
        $region16: #{tpu_custom_call.1} parent=11 // pred_fallthru
          _
        // Predicated region
        $region17: #{tpu_custom_call.1} parent=11 // pred_check
          %p152 = pneg %p102
        $region18: #{tpu_custom_call.1} parent=11 // pred_check_branch
          %154 = sbr.rel (%p152) target = $region20
        $region19: #{tpu_custom_call.1} parent=11 // pred_region
          %p155 = scmp.lt.s32.totalorder %s21, 0
          %s156 = scalar_select %p155, %s21, 0
          %s157 = scalar_lea.vmem %s2, %s156
        $region20: #{tpu_custom_call.1} parent=11 // pred_fallthru
          _
      $region12: #{tpu_custom_call.1} parent=5 // pred_fallthru
        _
      %p158 = scmp.lt.s32.totalorder %s12, 4
      // Predicated region
      $region21: #{tpu_custom_call.1} parent=5 // pred_check
        %p159 = pneg %p158
      $region22: #{tpu_custom_call.1} parent=5 // pred_check_branch
        %161 = sbr.rel (%p159) target = $region24
      $region23: #{tpu_custom_call.1} parent=5 // pred_region
        // Predicated region
        $region25: #{tpu_custom_call.1} parent=23 // pred_check
          %p162 = pneg %p44
        $region26: #{tpu_custom_call.1} parent=23 // pred_check_branch
          %164 = sbr.rel (%p162) target = $region28
        $region27: #{tpu_custom_call.1} parent=23 // pred_region
          %s165 = smul.u32 64, %s20
          %p166 = scmp.lt.s32.totalorder %s165, 255
          %s167 = scalar_select %p166, %s165, 255
          %s168 = smul.addr %s167, 4
          %s169 = scalar_lea.vmem %s0, %s168
          %s170 = smul.u32 64, %s20
        $region28: #{tpu_custom_call.1} parent=23 // pred_fallthru
          _
      $region24: #{tpu_custom_call.1} parent=5 // pred_fallthru
        _
      %p171 = scmp.le.s32.totalorder 1, %s12
      %p172 = scmp.lt.s32.totalorder %s12, 5
      %p173 = pnand %p171, %p172
      %p174 = pneg %p173
      // Predicated region
      $region29: #{tpu_custom_call.1} parent=5 // pred_check
        _
      $region30: #{tpu_custom_call.1} parent=5 // pred_check_branch
        %176 = sbr.rel (%p173) target = $region32
      $region31: #{tpu_custom_call.1} parent=5 // pred_region
        %s177 = ssub.s32 %s12, 1
        %s178 = smul.u32 64, %s22
        %p179 = scmp.lt.s32.totalorder %s178, 255
        %s180 = scalar_select %p179, %s178, 255
        %s181 = smul.addr %s180, 4
        %s182 = scalar_lea.vmem %s0, %s181
        %p183 = pneg %p50
        %p184 = pneg %p47
        %p185 = scmp.lt.s32.totalorder %s21, 0
        %s186 = scalar_select %p185, %s21, 0
        %s187 = smul.addr %s186, 4
        %s188 = scalar_lea.vmem %s1, %s187
        %p189 = pneg %p76
        %p190 = pneg %p73
        %p191 = scmp.lt.s32.totalorder %s21, 0
        %s192 = scalar_select %p191, %s21, 0
        %s193 = scalar_lea.vmem %s2, %s192
        %p194 = pneg %p102
        %p195 = pneg %p99
        %p196 = pneg %p130
        %p197 = pneg %p127
        %s198 = sand.u32 %s117, 1
        %s199 = scalar_lea.sflag [#allocation3], %s198
        %s200 = sand.u32 %s117, 1
        %s201 = smul.addr %s200, 256
        %s202 = scalar_lea.vmem [#allocation2], %s201
        %s203 = smul.u32 64, %s22
        %p204 = scmp.lt.s32.totalorder %s203, 255
        %s205 = scalar_select %p204, %s203, 255
        %s206 = smul.addr %s205, 4
        %s207 = scalar_lea.vmem %s0, %s206
        %s208 = smul.u32 64, %s22
        %p209 = scmp.lt.s32.totalorder %s21, 0
        %s210 = scalar_select %p209, %s21, 0
        %s211 = smul.addr %s210, 4
        %s212 = scalar_lea.vmem %s1, %s211
        %p213 = scmp.lt.s32.totalorder %s21, 0
        %s214 = scalar_select %p213, %s21, 0
        %s215 = scalar_lea.vmem %s2, %s214
        %s216 = smul.u32 64, %s22
        %v218 = vld [vmem:[%s207] sm:$0xf]
        %v219 = vld [vmem:[%s207 + $0x4] sm:$0xf]
        %v220 = vld [vmem:[%s207 + $0x8] sm:$0xf]
        %v221 = vld [vmem:[%s207 + $0xc] sm:$0xf]
        %v222 = vld [vmem:[%s207 + $0x10] sm:$0xf]
        %v223 = vld [vmem:[%s207 + $0x14] sm:$0xf]
        %v224 = vld [vmem:[%s207 + $0x18] sm:$0xf]
        %v225 = vld [vmem:[%s207 + $0x1c] sm:$0xf]
        %v226 = vld [vmem:[%s207 + $0x20] sm:$0xf]
        %v227 = vld [vmem:[%s207 + $0x24] sm:$0xf]
        %v228 = vld [vmem:[%s207 + $0x28] sm:$0xf]
        %v229 = vld [vmem:[%s207 + $0x2c] sm:$0xf]
        %v230 = vld [vmem:[%s207 + $0x30] sm:$0xf]
        %v231 = vld [vmem:[%s207 + $0x34] sm:$0xf]
        %v232 = vld [vmem:[%s207 + $0x38] sm:$0xf]
        %v233 = vld [vmem:[%s207 + $0x3c] sm:$0xf]
        %v234 = vld [vmem:[%s207 + $0x40] sm:$0xf]
        %v235 = vld [vmem:[%s207 + $0x44] sm:$0xf]
        %v236 = vld [vmem:[%s207 + $0x48] sm:$0xf]
        %v237 = vld [vmem:[%s207 + $0x4c] sm:$0xf]
        %v238 = vld [vmem:[%s207 + $0x50] sm:$0xf]
        %v239 = vld [vmem:[%s207 + $0x54] sm:$0xf]
        %v240 = vld [vmem:[%s207 + $0x58] sm:$0xf]
        %v241 = vld [vmem:[%s207 + $0x5c] sm:$0xf]
        %v242 = vld [vmem:[%s207 + $0x60] sm:$0xf]
        %v243 = vld [vmem:[%s207 + $0x64] sm:$0xf]
        %v244 = vld [vmem:[%s207 + $0x68] sm:$0xf]
        %v245 = vld [vmem:[%s207 + $0x6c] sm:$0xf]
        %v246 = vld [vmem:[%s207 + $0x70] sm:$0xf]
        %v247 = vld [vmem:[%s207 + $0x74] sm:$0xf]
        %v248 = vld [vmem:[%s207 + $0x78] sm:$0xf]
        %v249 = vld [vmem:[%s207 + $0x7c] sm:$0xf]
        %v250 = vld [vmem:[%s207 + $0x80] sm:$0xf]
        %v251 = vld [vmem:[%s207 + $0x84] sm:$0xf]
        %v252 = vld [vmem:[%s207 + $0x88] sm:$0xf]
        %v253 = vld [vmem:[%s207 + $0x8c] sm:$0xf]
        %v254 = vld [vmem:[%s207 + $0x90] sm:$0xf]
        %v255 = vld [vmem:[%s207 + $0x94] sm:$0xf]
        %v256 = vld [vmem:[%s207 + $0x98] sm:$0xf]
        %v257 = vld [vmem:[%s207 + $0x9c] sm:$0xf]
        %v258 = vld [vmem:[%s207 + $0xa0] sm:$0xf]
        %v259 = vld [vmem:[%s207 + $0xa4] sm:$0xf]
        %v260 = vld [vmem:[%s207 + $0xa8] sm:$0xf]
        %v261 = vld [vmem:[%s207 + $0xac] sm:$0xf]
        %v262 = vld [vmem:[%s207 + $0xb0] sm:$0xf]
        %v263 = vld [vmem:[%s207 + $0xb4] sm:$0xf]
        %v264 = vld [vmem:[%s207 + $0xb8] sm:$0xf]
        %v265 = vld [vmem:[%s207 + $0xbc] sm:$0xf]
        %v266 = vld [vmem:[%s207 + $0xc0] sm:$0xf]
        %v267 = vld [vmem:[%s207 + $0xc4] sm:$0xf]
        %v268 = vld [vmem:[%s207 + $0xc8] sm:$0xf]
        %v269 = vld [vmem:[%s207 + $0xcc] sm:$0xf]
        %v270 = vld [vmem:[%s207 + $0xd0] sm:$0xf]
        %v271 = vld [vmem:[%s207 + $0xd4] sm:$0xf]
        %v272 = vld [vmem:[%s207 + $0xd8] sm:$0xf]
        %v273 = vld [vmem:[%s207 + $0xdc] sm:$0xf]
        %v274 = vld [vmem:[%s207 + $0xe0] sm:$0xf]
        %v275 = vld [vmem:[%s207 + $0xe4] sm:$0xf]
        %v276 = vld [vmem:[%s207 + $0xe8] sm:$0xf]
        %v277 = vld [vmem:[%s207 + $0xec] sm:$0xf]
        %v278 = vld [vmem:[%s207 + $0xf0] sm:$0xf]
        %v279 = vld [vmem:[%s207 + $0xf4] sm:$0xf]
        %v280 = vld [vmem:[%s207 + $0xf8] sm:$0xf]
        %v281 = vld [vmem:[%s207 + $0xfc] sm:$0xf]
        %v282 = vld [vmem:[%s212] sm:$0xf]
        %v283 = vld [vmem:[%s212 + $0x4] sm:$0xf]
        %v284 = vld [vmem:[%s212 + $0x8] sm:$0xf]
        %v285 = vld [vmem:[%s212 + $0xc] sm:$0xf]
        %v286 = vld [vmem:[%s215] sm:$0x1]
        %v288 = vlaneseq
        %v289 = vshrl.u32 %v288, 7
        %v290 = vsub.s32 0, %v289
        %v291 = vrot.slane %v286, %v290
        %v357 = vunpack.c.l.b16 %v218
        %v358 = vunpack.c.l.b16 %v219
        %v359 = vunpack.c.l.b16 %v220
        %v360 = vunpack.c.l.b16 %v221
        %v361 = vunpack.c.l.b16 %v222
        %v362 = vunpack.c.l.b16 %v223
        %v363 = vunpack.c.l.b16 %v224
        %v364 = vunpack.c.l.b16 %v225
        %v365 = vunpack.c.l.b16 %v226
        %v366 = vunpack.c.l.b16 %v227
        %v367 = vunpack.c.l.b16 %v228
        %v368 = vunpack.c.l.b16 %v229
        %v369 = vunpack.c.l.b16 %v230
        %v370 = vunpack.c.l.b16 %v231
        %v371 = vunpack.c.l.b16 %v232
        %v372 = vunpack.c.l.b16 %v233
        %v373 = vunpack.c.l.b16 %v234
        %v374 = vunpack.c.l.b16 %v235
        %v375 = vunpack.c.l.b16 %v236
        %v376 = vunpack.c.l.b16 %v237
        %v377 = vunpack.c.l.b16 %v238
        %v378 = vunpack.c.l.b16 %v239
        %v379 = vunpack.c.l.b16 %v240
        %v380 = vunpack.c.l.b16 %v241
        %v381 = vunpack.c.l.b16 %v242
        %v382 = vunpack.c.l.b16 %v243
        %v383 = vunpack.c.l.b16 %v244
        %v384 = vunpack.c.l.b16 %v245
        %v385 = vunpack.c.l.b16 %v246
        %v386 = vunpack.c.l.b16 %v247
        %v387 = vunpack.c.l.b16 %v248
        %v388 = vunpack.c.l.b16 %v249
        %v389 = vunpack.c.l.b16 %v250
        %v390 = vunpack.c.l.b16 %v251
        %v391 = vunpack.c.l.b16 %v252
        %v392 = vunpack.c.l.b16 %v253
        %v393 = vunpack.c.l.b16 %v254
        %v394 = vunpack.c.l.b16 %v255
        %v395 = vunpack.c.l.b16 %v256
        %v396 = vunpack.c.l.b16 %v257
        %v397 = vunpack.c.l.b16 %v258
        %v398 = vunpack.c.l.b16 %v259
        %v399 = vunpack.c.l.b16 %v260
        %v400 = vunpack.c.l.b16 %v261
        %v401 = vunpack.c.l.b16 %v262
        %v402 = vunpack.c.l.b16 %v263
        %v403 = vunpack.c.l.b16 %v264
        %v404 = vunpack.c.l.b16 %v265
        %v405 = vunpack.c.l.b16 %v266
        %v406 = vunpack.c.l.b16 %v267
        %v407 = vunpack.c.l.b16 %v268
        %v408 = vunpack.c.l.b16 %v269
        %v409 = vunpack.c.l.b16 %v270
        %v410 = vunpack.c.l.b16 %v271
        %v411 = vunpack.c.l.b16 %v272
        %v412 = vunpack.c.l.b16 %v273
        %v413 = vunpack.c.l.b16 %v274
        %v414 = vunpack.c.l.b16 %v275
        %v415 = vunpack.c.l.b16 %v276
        %v416 = vunpack.c.l.b16 %v277
        %v417 = vunpack.c.l.b16 %v278
        %v418 = vunpack.c.l.b16 %v279
        %v419 = vunpack.c.l.b16 %v280
        %v420 = vunpack.c.l.b16 %v281
        %v421 = vpack.c.b16 %v358, %v357
        %v422 = vpack.c.b16 %v360, %v359
        %v423 = vpack.c.b16 %v362, %v361
        %v424 = vpack.c.b16 %v364, %v363
        %v425 = vpack.c.b16 %v366, %v365
        %v426 = vpack.c.b16 %v368, %v367
        %v427 = vpack.c.b16 %v370, %v369
        %v428 = vpack.c.b16 %v372, %v371
        %v429 = vpack.c.b16 %v374, %v373
        %v430 = vpack.c.b16 %v376, %v375
        %v431 = vpack.c.b16 %v378, %v377
        %v432 = vpack.c.b16 %v380, %v379
        %v433 = vpack.c.b16 %v382, %v381
        %v434 = vpack.c.b16 %v384, %v383
        %v435 = vpack.c.b16 %v386, %v385
        %v436 = vpack.c.b16 %v388, %v387
        %v437 = vpack.c.b16 %v390, %v389
        %v438 = vpack.c.b16 %v392, %v391
        %v439 = vpack.c.b16 %v394, %v393
        %v440 = vpack.c.b16 %v396, %v395
        %v441 = vpack.c.b16 %v398, %v397
        %v442 = vpack.c.b16 %v400, %v399
        %v443 = vpack.c.b16 %v402, %v401
        %v444 = vpack.c.b16 %v404, %v403
        %v445 = vpack.c.b16 %v406, %v405
        %v446 = vpack.c.b16 %v408, %v407
        %v447 = vpack.c.b16 %v410, %v409
        %v448 = vpack.c.b16 %v412, %v411
        %v449 = vpack.c.b16 %v414, %v413
        %v450 = vpack.c.b16 %v416, %v415
        %v451 = vpack.c.b16 %v418, %v417
        %v452 = vpack.c.b16 %v420, %v419
        %v457 = vunpack.c.l.b16 %v282
        %v458 = vunpack.c.l.b16 %v283
        %v459 = vunpack.c.l.b16 %v284
        %v460 = vunpack.c.l.b16 %v285
        %v461 = vpack.c.b16 %v458, %v457
        %v462 = vpack.c.b16 %v460, %v459
        %vm465 = vcmask 261120
        %v467 = vsel %vm465, %v421, 0
        %v470 = vsel %vm465, %v422, 0
        %v473 = vsel %vm465, %v423, 0
        %v476 = vsel %vm465, %v424, 0
        %v479 = vsel %vm465, %v425, 0
        %v482 = vsel %vm465, %v426, 0
        %v485 = vsel %vm465, %v427, 0
        %v488 = vsel %vm465, %v428, 0
        %v491 = vsel %vm465, %v429, 0
        %v494 = vsel %vm465, %v430, 0
        %v497 = vsel %vm465, %v431, 0
        %v500 = vsel %vm465, %v432, 0
        %v503 = vsel %vm465, %v433, 0
        %v506 = vsel %vm465, %v434, 0
        %v509 = vsel %vm465, %v435, 0
        %v512 = vsel %vm465, %v436, 0
        %v515 = vsel %vm465, %v437, 0
        %v518 = vsel %vm465, %v438, 0
        %v521 = vsel %vm465, %v439, 0
        %v524 = vsel %vm465, %v440, 0
        %v527 = vsel %vm465, %v441, 0
        %v530 = vsel %vm465, %v442, 0
        %v533 = vsel %vm465, %v443, 0
        %v536 = vsel %vm465, %v444, 0
        %v539 = vsel %vm465, %v445, 0
        %v542 = vsel %vm465, %v446, 0
        %v545 = vsel %vm465, %v447, 0
        %v548 = vsel %vm465, %v448, 0
        %v551 = vsel %vm465, %v449, 0
        %v554 = vsel %vm465, %v450, 0
        %v557 = vsel %vm465, %v451, 0
        %v560 = vsel %vm465, %v452, 0
        %562 = vmatprep.subr.bf16.mxu0 0
        %563 = vmatpush1.bf16.msra.mxu0 %v461
        %564 = vmatprep.subr.bf16.mxu0 0
        %565 = vmatpush1.bf16.msra.mxu0 %v462
        %566 = vmatprep.subr.bf16.mxu0 0
        %567 = vmatpush1.bf16.msra.mxu0 0
        %568 = vmatprep.subr.bf16.mxu0 0
        %569 = vmatpush1.bf16.msra.mxu0 0
        %570 = vmatprep.subr.bf16.mxu0 0
        %571 = vmatpush1.bf16.msra.mxu0 0
        %572 = vmatprep.subr.bf16.mxu0 0
        %573 = vmatpush1.bf16.msra.mxu0 0
        %574 = vmatprep.subr.bf16.mxu0 0
        %575 = vmatpush1.bf16.msra.mxu0 0
        %576 = vmatprep.subr.bf16.mxu0 0
        %577 = vmatpush1.bf16.msra.mxu0 0
        %578 = vmatprep.subr.bf16.mxu0 0
        %579 = vmatpush1.bf16.msra.mxu0 0
        %580 = vmatprep.subr.bf16.mxu0 0
        %581 = vmatpush1.bf16.msra.mxu0 0
        %582 = vmatprep.subr.bf16.mxu0 0
        %583 = vmatpush1.bf16.msra.mxu0 0
        %584 = vmatprep.subr.bf16.mxu0 0
        %585 = vmatpush1.bf16.msra.mxu0 0
        %586 = vmatprep.subr.bf16.mxu0 0
        %587 = vmatpush1.bf16.msra.mxu0 0
        %588 = vmatprep.subr.bf16.mxu0 0
        %589 = vmatpush1.bf16.msra.mxu0 0
        %590 = vmatprep.subr.bf16.mxu0 0
        %591 = vmatpush1.bf16.msra.mxu0 0
        %592 = vmatprep.subr.bf16.mxu0 0
        %593 = vmatpush1.bf16.msra.mxu0 0
        %594 = vmatprep.mubr.bf16.mxu0 0
        %595 = vmatmul.mubr.bf16.gmra.mrb[0].mxu0 %v467
        %v596 = vpop.f32.mrb[0].mxu0
        %v597 = vadd.f32 %v291, %v596
        %v598 = vpop.f32.mrb[0].mxu0
        %v599 = vpop.f32.mrb[0].mxu0
        %v600 = vadd.f32 %v291, %v599
        %v601 = vpop.f32.mrb[0].mxu0
        %602 = vmatprep.mubr.bf16.mxu0 0
        %603 = vmatmul.mubr.bf16.gmra.mrb[0].mxu0 %v470
        %v604 = vpop.f32.mrb[0].mxu0
        %v605 = vadd.f32 %v291, %v604
        %v606 = vpop.f32.mrb[0].mxu0
        %v607 = vpop.f32.mrb[0].mxu0
        %v608 = vadd.f32 %v291, %v607
        %v609 = vpop.f32.mrb[0].mxu0
        %610 = vmatprep.mubr.bf16.mxu0 0
        %611 = vmatmul.mubr.bf16.gmra.mrb[0].mxu0 %v473
        %v612 = vpop.f32.mrb[0].mxu0
        %v613 = vadd.f32 %v291, %v612
        %v614 = vpop.f32.mrb[0].mxu0
        %v615 = vpop.f32.mrb[0].mxu0
        %v616 = vadd.f32 %v291, %v615
        %v617 = vpop.f32.mrb[0].mxu0
        %618 = vmatprep.mubr.bf16.mxu0 0
        %619 = vmatmul.mubr.bf16.gmra.mrb[0].mxu0 %v476
        %v620 = vpop.f32.mrb[0].mxu0
        %v621 = vadd.f32 %v291, %v620
        %v622 = vpop.f32.mrb[0].mxu0
        %v623 = vpop.f32.mrb[0].mxu0
        %v624 = vadd.f32 %v291, %v623
        %v625 = vpop.f32.mrb[0].mxu0
        %626 = vmatprep.mubr.bf16.mxu0 0
        %627 = vmatmul.mubr.bf16.gmra.mrb[0].mxu0 %v479
        %v628 = vpop.f32.mrb[0].mxu0
        %v629 = vadd.f32 %v291, %v628
        %v630 = vpop.f32.mrb[0].mxu0
        %v631 = vpop.f32.mrb[0].mxu0
        %v632 = vadd.f32 %v291, %v631
        %v633 = vpop.f32.mrb[0].mxu0
        %634 = vmatprep.mubr.bf16.mxu0 0
        %635 = vmatmul.mubr.bf16.gmra.mrb[0].mxu0 %v482
        %v636 = vpop.f32.mrb[0].mxu0
        %v637 = vadd.f32 %v291, %v636
        %v638 = vpop.f32.mrb[0].mxu0
        %v639 = vpop.f32.mrb[0].mxu0
        %v640 = vadd.f32 %v291, %v639
        %v641 = vpop.f32.mrb[0].mxu0
        %642 = vmatprep.mubr.bf16.mxu0 0
        %643 = vmatmul.mubr.bf16.gmra.mrb[0].mxu0 %v485
        %v644 = vpop.f32.mrb[0].mxu0
        %v645 = vadd.f32 %v291, %v644
        %v646 = vpop.f32.mrb[0].mxu0
        %v647 = vpop.f32.mrb[0].mxu0
        %v648 = vadd.f32 %v291, %v647
        %v649 = vpop.f32.mrb[0].mxu0
        %650 = vmatprep.mubr.bf16.mxu0 0
        %651 = vmatmul.mubr.bf16.gmra.mrb[0].mxu0 %v488
        %v652 = vpop.f32.mrb[0].mxu0
        %v653 = vadd.f32 %v291, %v652
        %v654 = vpop.f32.mrb[0].mxu0
        %v655 = vpop.f32.mrb[0].mxu0
        %v656 = vadd.f32 %v291, %v655
        %v657 = vpop.f32.mrb[0].mxu0
        %658 = vmatprep.mubr.bf16.mxu0 0
        %659 = vmatmul.mubr.bf16.gmra.mrb[0].mxu0 %v491
        %v660 = vpop.f32.mrb[0].mxu0
        %v661 = vadd.f32 %v291, %v660
        %v662 = vpop.f32.mrb[0].mxu0
        %v663 = vpop.f32.mrb[0].mxu0
        %v664 = vadd.f32 %v291, %v663
        %v665 = vpop.f32.mrb[0].mxu0
        %666 = vmatprep.mubr.bf16.mxu0 0
        %667 = vmatmul.mubr.bf16.gmra.mrb[0].mxu0 %v494
        %v668 = vpop.f32.mrb[0].mxu0
        %v669 = vadd.f32 %v291, %v668
        %v670 = vpop.f32.mrb[0].mxu0
        %v671 = vpop.f32.mrb[0].mxu0
        %v672 = vadd.f32 %v291, %v671
        %v673 = vpop.f32.mrb[0].mxu0
        %674 = vmatprep.mubr.bf16.mxu0 0
        %675 = vmatmul.mubr.bf16.gmra.mrb[0].mxu0 %v497
        %v676 = vpop.f32.mrb[0].mxu0
        %v677 = vadd.f32 %v291, %v676
        %v678 = vpop.f32.mrb[0].mxu0
        %v679 = vpop.f32.mrb[0].mxu0
        %v680 = vadd.f32 %v291, %v679
        %v681 = vpop.f32.mrb[0].mxu0
        %682 = vmatprep.mubr.bf16.mxu0 0
        %683 = vmatmul.mubr.bf16.gmra.mrb[0].mxu0 %v500
        %v684 = vpop.f32.mrb[0].mxu0
        %v685 = vadd.f32 %v291, %v684
        %v686 = vpop.f32.mrb[0].mxu0
        %v687 = vpop.f32.mrb[0].mxu0
        %v688 = vadd.f32 %v291, %v687
        %v689 = vpop.f32.mrb[0].mxu0
        %690 = vmatprep.mubr.bf16.mxu0 0
        %691 = vmatmul.mubr.bf16.gmra.mrb[0].mxu0 %v503
        %v692 = vpop.f32.mrb[0].mxu0
        %v693 = vadd.f32 %v291, %v692
        %v694 = vpop.f32.mrb[0].mxu0
        %v695 = vpop.f32.mrb[0].mxu0
        %v696 = vadd.f32 %v291, %v695
        %v697 = vpop.f32.mrb[0].mxu0
        %698 = vmatprep.mubr.bf16.mxu0 0
        %699 = vmatmul.mubr.bf16.gmra.mrb[0].mxu0 %v506
        %v700 = vpop.f32.mrb[0].mxu0
        %v701 = vadd.f32 %v291, %v700
        %v702 = vpop.f32.mrb[0].mxu0
        %v703 = vpop.f32.mrb[0].mxu0
        %v704 = vadd.f32 %v291, %v703
        %v705 = vpop.f32.mrb[0].mxu0
        %706 = vmatprep.mubr.bf16.mxu0 0
        %707 = vmatmul.mubr.bf16.gmra.mrb[0].mxu0 %v509
        %v708 = vpop.f32.mrb[0].mxu0
        %v709 = vadd.f32 %v291, %v708
        %v710 = vpop.f32.mrb[0].mxu0
        %v711 = vpop.f32.mrb[0].mxu0
        %v712 = vadd.f32 %v291, %v711
        %v713 = vpop.f32.mrb[0].mxu0
        %714 = vmatprep.mubr.bf16.mxu0 0
        %715 = vmatmul.mubr.bf16.gmra.mrb[0].mxu0 %v512
        %v716 = vpop.f32.mrb[0].mxu0
        %v717 = vadd.f32 %v291, %v716
        %v718 = vpop.f32.mrb[0].mxu0
        %v719 = vpop.f32.mrb[0].mxu0
        %v720 = vadd.f32 %v291, %v719
        %v721 = vpop.f32.mrb[0].mxu0
        %722 = vmatprep.mubr.bf16.mxu0 0
        %723 = vmatmul.mubr.bf16.gmra.mrb[0].mxu0 %v515
        %v724 = vpop.f32.mrb[0].mxu0
        %v725 = vadd.f32 %v291, %v724
        %v726 = vpop.f32.mrb[0].mxu0
        %v727 = vpop.f32.mrb[0].mxu0
        %v728 = vadd.f32 %v291, %v727
        %v729 = vpop.f32.mrb[0].mxu0
        %730 = vmatprep.mubr.bf16.mxu0 0
        %731 = vmatmul.mubr.bf16.gmra.mrb[0].mxu0 %v518
        %v732 = vpop.f32.mrb[0].mxu0
        %v733 = vadd.f32 %v291, %v732
        %v734 = vpop.f32.mrb[0].mxu0
        %v735 = vpop.f32.mrb[0].mxu0
        %v736 = vadd.f32 %v291, %v735
        %v737 = vpop.f32.mrb[0].mxu0
        %738 = vmatprep.mubr.bf16.mxu0 0
        %739 = vmatmul.mubr.bf16.gmra.mrb[0].mxu0 %v521
        %v740 = vpop.f32.mrb[0].mxu0
        %v741 = vadd.f32 %v291, %v740
        %v742 = vpop.f32.mrb[0].mxu0
        %v743 = vpop.f32.mrb[0].mxu0
        %v744 = vadd.f32 %v291, %v743
        %v745 = vpop.f32.mrb[0].mxu0
        %746 = vmatprep.mubr.bf16.mxu0 0
        %747 = vmatmul.mubr.bf16.gmra.mrb[0].mxu0 %v524
        %v748 = vpop.f32.mrb[0].mxu0
        %v749 = vadd.f32 %v291, %v748
        %v750 = vpop.f32.mrb[0].mxu0
        %v751 = vpop.f32.mrb[0].mxu0
        %v752 = vadd.f32 %v291, %v751
        %v753 = vpop.f32.mrb[0].mxu0
        %754 = vmatprep.mubr.bf16.mxu0 0
        %755 = vmatmul.mubr.bf16.gmra.mrb[0].mxu0 %v527
        %v756 = vpop.f32.mrb[0].mxu0
        %v757 = vadd.f32 %v291, %v756
        %v758 = vpop.f32.mrb[0].mxu0
        %v759 = vpop.f32.mrb[0].mxu0
        %v760 = vadd.f32 %v291, %v759
        %v761 = vpop.f32.mrb[0].mxu0
        %762 = vmatprep.mubr.bf16.mxu0 0
        %763 = vmatmul.mubr.bf16.gmra.mrb[0].mxu0 %v530
        %v764 = vpop.f32.mrb[0].mxu0
        %v765 = vadd.f32 %v291, %v764
        %v766 = vpop.f32.mrb[0].mxu0
        %v767 = vpop.f32.mrb[0].mxu0
        %v768 = vadd.f32 %v291, %v767
        %v769 = vpop.f32.mrb[0].mxu0
        %770 = vmatprep.mubr.bf16.mxu0 0
        %771 = vmatmul.mubr.bf16.gmra.mrb[0].mxu0 %v533
        %v772 = vpop.f32.mrb[0].mxu0
        %v773 = vadd.f32 %v291, %v772
        %v774 = vpop.f32.mrb[0].mxu0
        %v775 = vpop.f32.mrb[0].mxu0
        %v776 = vadd.f32 %v291, %v775
        %v777 = vpop.f32.mrb[0].mxu0
        %778 = vmatprep.mubr.bf16.mxu0 0
        %779 = vmatmul.mubr.bf16.gmra.mrb[0].mxu0 %v536
        %v780 = vpop.f32.mrb[0].mxu0
        %v781 = vadd.f32 %v291, %v780
        %v782 = vpop.f32.mrb[0].mxu0
        %v783 = vpop.f32.mrb[0].mxu0
        %v784 = vadd.f32 %v291, %v783
        %v785 = vpop.f32.mrb[0].mxu0
        %786 = vmatprep.mubr.bf16.mxu0 0
        %787 = vmatmul.mubr.bf16.gmra.mrb[0].mxu0 %v539
        %v788 = vpop.f32.mrb[0].mxu0
        %v789 = vadd.f32 %v291, %v788
        %v790 = vpop.f32.mrb[0].mxu0
        %v791 = vpop.f32.mrb[0].mxu0
        %v792 = vadd.f32 %v291, %v791
        %v793 = vpop.f32.mrb[0].mxu0
        %794 = vmatprep.mubr.bf16.mxu0 0
        %795 = vmatmul.mubr.bf16.gmra.mrb[0].mxu0 %v542
        %v796 = vpop.f32.mrb[0].mxu0
        %v797 = vadd.f32 %v291, %v796
        %v798 = vpop.f32.mrb[0].mxu0
        %v799 = vpop.f32.mrb[0].mxu0
        %v800 = vadd.f32 %v291, %v799
        %v801 = vpop.f32.mrb[0].mxu0
        %802 = vmatprep.mubr.bf16.mxu0 0
        %803 = vmatmul.mubr.bf16.gmra.mrb[0].mxu0 %v545
        %v804 = vpop.f32.mrb[0].mxu0
        %v805 = vadd.f32 %v291, %v804
        %v806 = vpop.f32.mrb[0].mxu0
        %v807 = vpop.f32.mrb[0].mxu0
        %v808 = vadd.f32 %v291, %v807
        %v809 = vpop.f32.mrb[0].mxu0
        %810 = vmatprep.mubr.bf16.mxu0 0
        %811 = vmatmul.mubr.bf16.gmra.mrb[0].mxu0 %v548
        %v812 = vpop.f32.mrb[0].mxu0
        %v813 = vadd.f32 %v291, %v812
        %v814 = vpop.f32.mrb[0].mxu0
        %v815 = vpop.f32.mrb[0].mxu0
        %v816 = vadd.f32 %v291, %v815
        %v817 = vpop.f32.mrb[0].mxu0
        %818 = vmatprep.mubr.bf16.mxu0 0
        %819 = vmatmul.mubr.bf16.gmra.mrb[0].mxu0 %v551
        %v820 = vpop.f32.mrb[0].mxu0
        %v821 = vadd.f32 %v291, %v820
        %v822 = vpop.f32.mrb[0].mxu0
        %v823 = vpop.f32.mrb[0].mxu0
        %v824 = vadd.f32 %v291, %v823
        %v825 = vpop.f32.mrb[0].mxu0
        %826 = vmatprep.mubr.bf16.mxu0 0
        %827 = vmatmul.mubr.bf16.gmra.mrb[0].mxu0 %v554
        %v828 = vpop.f32.mrb[0].mxu0
        %v829 = vadd.f32 %v291, %v828
        %v830 = vpop.f32.mrb[0].mxu0
        %v831 = vpop.f32.mrb[0].mxu0
        %v832 = vadd.f32 %v291, %v831
        %v833 = vpop.f32.mrb[0].mxu0
        %834 = vmatprep.mubr.bf16.mxu0 0
        %835 = vmatmul.mubr.bf16.gmra.mrb[0].mxu0 %v557
        %v836 = vpop.f32.mrb[0].mxu0
        %v837 = vadd.f32 %v291, %v836
        %v838 = vpop.f32.mrb[0].mxu0
        %v839 = vpop.f32.mrb[0].mxu0
        %v840 = vadd.f32 %v291, %v839
        %v841 = vpop.f32.mrb[0].mxu0
        %842 = vmatprep.mubr.bf16.mxu0 0
        %843 = vmatmul.mubr.bf16.gmra.mrb[0].mxu0 %v560
        %v844 = vpop.f32.mrb[0].mxu0
        %v845 = vadd.f32 %v291, %v844
        %v846 = vpop.f32.mrb[0].mxu0
        %v847 = vpop.f32.mrb[0].mxu0
        %v848 = vadd.f32 %v291, %v847
        %v849 = vpop.f32.mrb[0].mxu0
        %850 = vdwg.mxu0
        %v851 = vmax.f32 %v597, 0.0
        %v852 = vmax.f32 %v600, 0.0
        %v853 = vmax.f32 %v605, 0.0
        %v854 = vmax.f32 %v608, 0.0
        %v855 = vmax.f32 %v613, 0.0
        %v856 = vmax.f32 %v616, 0.0
        %v857 = vmax.f32 %v621, 0.0
        %v858 = vmax.f32 %v624, 0.0
        %v859 = vmax.f32 %v629, 0.0
        %v860 = vmax.f32 %v632, 0.0
        %v861 = vmax.f32 %v637, 0.0
        %v862 = vmax.f32 %v640, 0.0
        %v863 = vmax.f32 %v645, 0.0
        %v864 = vmax.f32 %v648, 0.0
        %v865 = vmax.f32 %v653, 0.0
        %v866 = vmax.f32 %v656, 0.0
        %v867 = vmax.f32 %v661, 0.0
        %v868 = vmax.f32 %v664, 0.0
        %v869 = vmax.f32 %v669, 0.0
        %v870 = vmax.f32 %v672, 0.0
        %v871 = vmax.f32 %v677, 0.0
        %v872 = vmax.f32 %v680, 0.0
        %v873 = vmax.f32 %v685, 0.0
        %v874 = vmax.f32 %v688, 0.0
        %v875 = vmax.f32 %v693, 0.0
        %v876 = vmax.f32 %v696, 0.0
        %v877 = vmax.f32 %v701, 0.0
        %v878 = vmax.f32 %v704, 0.0
        %v879 = vmax.f32 %v709, 0.0
        %v880 = vmax.f32 %v712, 0.0
        %v881 = vmax.f32 %v717, 0.0
        %v882 = vmax.f32 %v720, 0.0
        %v883 = vmax.f32 %v725, 0.0
        %v884 = vmax.f32 %v728, 0.0
        %v885 = vmax.f32 %v733, 0.0
        %v886 = vmax.f32 %v736, 0.0
        %v887 = vmax.f32 %v741, 0.0
        %v888 = vmax.f32 %v744, 0.0
        %v889 = vmax.f32 %v749, 0.0
        %v890 = vmax.f32 %v752, 0.0
        %v891 = vmax.f32 %v757, 0.0
        %v892 = vmax.f32 %v760, 0.0
        %v893 = vmax.f32 %v765, 0.0
        %v894 = vmax.f32 %v768, 0.0
        %v895 = vmax.f32 %v773, 0.0
        %v896 = vmax.f32 %v776, 0.0
        %v897 = vmax.f32 %v781, 0.0
        %v898 = vmax.f32 %v784, 0.0
        %v899 = vmax.f32 %v789, 0.0
        %v900 = vmax.f32 %v792, 0.0
        %v901 = vmax.f32 %v797, 0.0
        %v902 = vmax.f32 %v800, 0.0
        %v903 = vmax.f32 %v805, 0.0
        %v904 = vmax.f32 %v808, 0.0
        %v905 = vmax.f32 %v813, 0.0
        %v906 = vmax.f32 %v816, 0.0
        %v907 = vmax.f32 %v821, 0.0
        %v908 = vmax.f32 %v824, 0.0
        %v909 = vmax.f32 %v829, 0.0
        %v910 = vmax.f32 %v832, 0.0
        %v911 = vmax.f32 %v837, 0.0
        %v912 = vmax.f32 %v840, 0.0
        %v913 = vmax.f32 %v845, 0.0
        %v914 = vmax.f32 %v848, 0.0
        %v915 = vpack.c.bf16 %v852, %v851
        %v916 = vpack.c.bf16 %v854, %v853
        %v917 = vpack.c.bf16 %v856, %v855
        %v918 = vpack.c.bf16 %v858, %v857
        %v919 = vpack.c.bf16 %v860, %v859
        %v920 = vpack.c.bf16 %v862, %v861
        %v921 = vpack.c.bf16 %v864, %v863
        %v922 = vpack.c.bf16 %v866, %v865
        %v923 = vpack.c.bf16 %v868, %v867
        %v924 = vpack.c.bf16 %v870, %v869
        %v925 = vpack.c.bf16 %v872, %v871
        %v926 = vpack.c.bf16 %v874, %v873
        %v927 = vpack.c.bf16 %v876, %v875
        %v928 = vpack.c.bf16 %v878, %v877
        %v929 = vpack.c.bf16 %v880, %v879
        %v930 = vpack.c.bf16 %v882, %v881
        %v931 = vpack.c.bf16 %v884, %v883
        %v932 = vpack.c.bf16 %v886, %v885
        %v933 = vpack.c.bf16 %v888, %v887
        %v934 = vpack.c.bf16 %v890, %v889
        %v935 = vpack.c.bf16 %v892, %v891
        %v936 = vpack.c.bf16 %v894, %v893
        %v937 = vpack.c.bf16 %v896, %v895
        %v938 = vpack.c.bf16 %v898, %v897
        %v939 = vpack.c.bf16 %v900, %v899
        %v940 = vpack.c.bf16 %v902, %v901
        %v941 = vpack.c.bf16 %v904, %v903
        %v942 = vpack.c.bf16 %v906, %v905
        %v943 = vpack.c.bf16 %v908, %v907
        %v944 = vpack.c.bf16 %v910, %v909
        %v945 = vpack.c.bf16 %v912, %v911
        %v946 = vpack.c.bf16 %v914, %v913
        %v979 = vunpack.c.l.b16 %v915
        %v980 = vunpack.c.h.b16 %v915
        %v981 = vunpack.c.l.b16 %v916
        %v982 = vunpack.c.h.b16 %v916
        %v983 = vunpack.c.l.b16 %v917
        %v984 = vunpack.c.h.b16 %v917
        %v985 = vunpack.c.l.b16 %v918
        %v986 = vunpack.c.h.b16 %v918
        %v987 = vunpack.c.l.b16 %v919
        %v988 = vunpack.c.h.b16 %v919
        %v989 = vunpack.c.l.b16 %v920
        %v990 = vunpack.c.h.b16 %v920
        %v991 = vunpack.c.l.b16 %v921
        %v992 = vunpack.c.h.b16 %v921
        %v993 = vunpack.c.l.b16 %v922
        %v994 = vunpack.c.h.b16 %v922
        %v995 = vunpack.c.l.b16 %v923
        %v996 = vunpack.c.h.b16 %v923
        %v997 = vunpack.c.l.b16 %v924
        %v998 = vunpack.c.h.b16 %v924
        %v999 = vunpack.c.l.b16 %v925
        %v1000 = vunpack.c.h.b16 %v925
        %v1001 = vunpack.c.l.b16 %v926
        %v1002 = vunpack.c.h.b16 %v926
        %v1003 = vunpack.c.l.b16 %v927
        %v1004 = vunpack.c.h.b16 %v927
        %v1005 = vunpack.c.l.b16 %v928
        %v1006 = vunpack.c.h.b16 %v928
        %v1007 = vunpack.c.l.b16 %v929
        %v1008 = vunpack.c.h.b16 %v929
        %v1009 = vunpack.c.l.b16 %v930
        %v1010 = vunpack.c.h.b16 %v930
        %v1011 = vunpack.c.l.b16 %v931
        %v1012 = vunpack.c.h.b16 %v931
        %v1013 = vunpack.c.l.b16 %v932
        %v1014 = vunpack.c.h.b16 %v932
        %v1015 = vunpack.c.l.b16 %v933
        %v1016 = vunpack.c.h.b16 %v933
        %v1017 = vunpack.c.l.b16 %v934
        %v1018 = vunpack.c.h.b16 %v934
        %v1019 = vunpack.c.l.b16 %v935
        %v1020 = vunpack.c.h.b16 %v935
        %v1021 = vunpack.c.l.b16 %v936
        %v1022 = vunpack.c.h.b16 %v936
        %v1023 = vunpack.c.l.b16 %v937
        %v1024 = vunpack.c.h.b16 %v937
        %v1025 = vunpack.c.l.b16 %v938
        %v1026 = vunpack.c.h.b16 %v938
        %v1027 = vunpack.c.l.b16 %v939
        %v1028 = vunpack.c.h.b16 %v939
        %v1029 = vunpack.c.l.b16 %v940
        %v1030 = vunpack.c.h.b16 %v940
        %v1031 = vunpack.c.l.b16 %v941
        %v1032 = vunpack.c.h.b16 %v941
        %v1033 = vunpack.c.l.b16 %v942
        %v1034 = vunpack.c.h.b16 %v942
        %v1035 = vunpack.c.l.b16 %v943
        %v1036 = vunpack.c.h.b16 %v943
        %v1037 = vunpack.c.l.b16 %v944
        %v1038 = vunpack.c.h.b16 %v944
        %v1039 = vunpack.c.l.b16 %v945
        %v1040 = vunpack.c.h.b16 %v945
        %v1041 = vunpack.c.l.b16 %v946
        %v1042 = vunpack.c.h.b16 %v946
        %v1043 = vpack.c.b16 %v979, %v979
        %v1044 = vpack.c.b16 %v980, %v980
        %v1045 = vpack.c.b16 %v981, %v981
        %v1046 = vpack.c.b16 %v982, %v982
        %v1047 = vpack.c.b16 %v983, %v983
        %v1048 = vpack.c.b16 %v984, %v984
        %v1049 = vpack.c.b16 %v985, %v985
        %v1050 = vpack.c.b16 %v986, %v986
        %v1051 = vpack.c.b16 %v987, %v987
        %v1052 = vpack.c.b16 %v988, %v988
        %v1053 = vpack.c.b16 %v989, %v989
        %v1054 = vpack.c.b16 %v990, %v990
        %v1055 = vpack.c.b16 %v991, %v991
        %v1056 = vpack.c.b16 %v992, %v992
        %v1057 = vpack.c.b16 %v993, %v993
        %v1058 = vpack.c.b16 %v994, %v994
        %v1059 = vpack.c.b16 %v995, %v995
        %v1060 = vpack.c.b16 %v996, %v996
        %v1061 = vpack.c.b16 %v997, %v997
        %v1062 = vpack.c.b16 %v998, %v998
        %v1063 = vpack.c.b16 %v999, %v999
        %v1064 = vpack.c.b16 %v1000, %v1000
        %v1065 = vpack.c.b16 %v1001, %v1001
        %v1066 = vpack.c.b16 %v1002, %v1002
        %v1067 = vpack.c.b16 %v1003, %v1003
        %v1068 = vpack.c.b16 %v1004, %v1004
        %v1069 = vpack.c.b16 %v1005, %v1005
        %v1070 = vpack.c.b16 %v1006, %v1006
        %v1071 = vpack.c.b16 %v1007, %v1007
        %v1072 = vpack.c.b16 %v1008, %v1008
        %v1073 = vpack.c.b16 %v1009, %v1009
        %v1074 = vpack.c.b16 %v1010, %v1010
        %v1075 = vpack.c.b16 %v1011, %v1011
        %v1076 = vpack.c.b16 %v1012, %v1012
        %v1077 = vpack.c.b16 %v1013, %v1013
        %v1078 = vpack.c.b16 %v1014, %v1014
        %v1079 = vpack.c.b16 %v1015, %v1015
        %v1080 = vpack.c.b16 %v1016, %v1016
        %v1081 = vpack.c.b16 %v1017, %v1017
        %v1082 = vpack.c.b16 %v1018, %v1018
        %v1083 = vpack.c.b16 %v1019, %v1019
        %v1084 = vpack.c.b16 %v1020, %v1020
        %v1085 = vpack.c.b16 %v1021, %v1021
        %v1086 = vpack.c.b16 %v1022, %v1022
        %v1087 = vpack.c.b16 %v1023, %v1023
        %v1088 = vpack.c.b16 %v1024, %v1024
        %v1089 = vpack.c.b16 %v1025, %v1025
        %v1090 = vpack.c.b16 %v1026, %v1026
        %v1091 = vpack.c.b16 %v1027, %v1027
        %v1092 = vpack.c.b16 %v1028, %v1028
        %v1093 = vpack.c.b16 %v1029, %v1029
        %v1094 = vpack.c.b16 %v1030, %v1030
        %v1095 = vpack.c.b16 %v1031, %v1031
        %v1096 = vpack.c.b16 %v1032, %v1032
        %v1097 = vpack.c.b16 %v1033, %v1033
        %v1098 = vpack.c.b16 %v1034, %v1034
        %v1099 = vpack.c.b16 %v1035, %v1035
        %v1100 = vpack.c.b16 %v1036, %v1036
        %v1101 = vpack.c.b16 %v1037, %v1037
        %v1102 = vpack.c.b16 %v1038, %v1038
        %v1103 = vpack.c.b16 %v1039, %v1039
        %v1104 = vpack.c.b16 %v1040, %v1040
        %v1105 = vpack.c.b16 %v1041, %v1041
        %v1106 = vpack.c.b16 %v1042, %v1042
        %1171 = vst [vmem:[%s202] sm:$0xf] %v1043
        %1172 = vst [vmem:[%s202 + $0x4] sm:$0xf] %v1044
        %1173 = vst [vmem:[%s202 + $0x8] sm:$0xf] %v1045
        %1174 = vst [vmem:[%s202 + $0xc] sm:$0xf] %v1046
        %1175 = vst [vmem:[%s202 + $0x10] sm:$0xf] %v1047
        %1176 = vst [vmem:[%s202 + $0x14] sm:$0xf] %v1048
        %1177 = vst [vmem:[%s202 + $0x18] sm:$0xf] %v1049
        %1178 = vst [vmem:[%s202 + $0x1c] sm:$0xf] %v1050
        %1179 = vst [vmem:[%s202 + $0x20] sm:$0xf] %v1051
        %1180 = vst [vmem:[%s202 + $0x24] sm:$0xf] %v1052
        %1181 = vst [vmem:[%s202 + $0x28] sm:$0xf] %v1053
        %1182 = vst [vmem:[%s202 + $0x2c] sm:$0xf] %v1054
        %1183 = vst [vmem:[%s202 + $0x30] sm:$0xf] %v1055
        %1184 = vst [vmem:[%s202 + $0x34] sm:$0xf] %v1056
        %1185 = vst [vmem:[%s202 + $0x38] sm:$0xf] %v1057
        %1186 = vst [vmem:[%s202 + $0x3c] sm:$0xf] %v1058
        %1187 = vst [vmem:[%s202 + $0x40] sm:$0xf] %v1059
        %1188 = vst [vmem:[%s202 + $0x44] sm:$0xf] %v1060
        %1189 = vst [vmem:[%s202 + $0x48] sm:$0xf] %v1061
        %1190 = vst [vmem:[%s202 + $0x4c] sm:$0xf] %v1062
        %1191 = vst [vmem:[%s202 + $0x50] sm:$0xf] %v1063
        %1192 = vst [vmem:[%s202 + $0x54] sm:$0xf] %v1064
        %1193 = vst [vmem:[%s202 + $0x58] sm:$0xf] %v1065
        %1194 = vst [vmem:[%s202 + $0x5c] sm:$0xf] %v1066
        %1195 = vst [vmem:[%s202 + $0x60] sm:$0xf] %v1067
        %1196 = vst [vmem:[%s202 + $0x64] sm:$0xf] %v1068
        %1197 = vst [vmem:[%s202 + $0x68] sm:$0xf] %v1069
        %1198 = vst [vmem:[%s202 + $0x6c] sm:$0xf] %v1070
        %1199 = vst [vmem:[%s202 + $0x70] sm:$0xf] %v1071
        %1200 = vst [vmem:[%s202 + $0x74] sm:$0xf] %v1072
        %1201 = vst [vmem:[%s202 + $0x78] sm:$0xf] %v1073
        %1202 = vst [vmem:[%s202 + $0x7c] sm:$0xf] %v1074
        %1203 = vst [vmem:[%s202 + $0x80] sm:$0xf] %v1075
        %1204 = vst [vmem:[%s202 + $0x84] sm:$0xf] %v1076
        %1205 = vst [vmem:[%s202 + $0x88] sm:$0xf] %v1077
        %1206 = vst [vmem:[%s202 + $0x8c] sm:$0xf] %v1078
        %1207 = vst [vmem:[%s202 + $0x90] sm:$0xf] %v1079
        %1208 = vst [vmem:[%s202 + $0x94] sm:$0xf] %v1080
        %1209 = vst [vmem:[%s202 + $0x98] sm:$0xf] %v1081
        %1210 = vst [vmem:[%s202 + $0x9c] sm:$0xf] %v1082
        %1211 = vst [vmem:[%s202 + $0xa0] sm:$0xf] %v1083
        %1212 = vst [vmem:[%s202 + $0xa4] sm:$0xf] %v1084
        %1213 = vst [vmem:[%s202 + $0xa8] sm:$0xf] %v1085
        %1214 = vst [vmem:[%s202 + $0xac] sm:$0xf] %v1086
        %1215 = vst [vmem:[%s202 + $0xb0] sm:$0xf] %v1087
        %1216 = vst [vmem:[%s202 + $0xb4] sm:$0xf] %v1088
        %1217 = vst [vmem:[%s202 + $0xb8] sm:$0xf] %v1089
        %1218 = vst [vmem:[%s202 + $0xbc] sm:$0xf] %v1090
        %1219 = vst [vmem:[%s202 + $0xc0] sm:$0xf] %v1091
        %1220 = vst [vmem:[%s202 + $0xc4] sm:$0xf] %v1092
        %1221 = vst [vmem:[%s202 + $0xc8] sm:$0xf] %v1093
        %1222 = vst [vmem:[%s202 + $0xcc] sm:$0xf] %v1094
        %1223 = vst [vmem:[%s202 + $0xd0] sm:$0xf] %v1095
        %1224 = vst [vmem:[%s202 + $0xd4] sm:$0xf] %v1096
        %1225 = vst [vmem:[%s202 + $0xd8] sm:$0xf] %v1097
        %1226 = vst [vmem:[%s202 + $0xdc] sm:$0xf] %v1098
        %1227 = vst [vmem:[%s202 + $0xe0] sm:$0xf] %v1099
        %1228 = vst [vmem:[%s202 + $0xe4] sm:$0xf] %v1100
        %1229 = vst [vmem:[%s202 + $0xe8] sm:$0xf] %v1101
        %1230 = vst [vmem:[%s202 + $0xec] sm:$0xf] %v1102
        %1231 = vst [vmem:[%s202 + $0xf0] sm:$0xf] %v1103
        %1232 = vst [vmem:[%s202 + $0xf4] sm:$0xf] %v1104
        %1233 = vst [vmem:[%s202 + $0xf8] sm:$0xf] %v1105
        %1234 = vst [vmem:[%s202 + $0xfc] sm:$0xf] %v1106
        %s1235 = sand.u32 %s117, 1
        %s1236 = scalar_lea.sflag [#allocation3], %s1235
        %s1237 = sand.u32 %s117, 1
        %s1238 = smul.addr %s1237, 256
        %s1239 = scalar_lea.vmem [#allocation2], %s1238
        // Predicated region
        $region33: #{tpu_custom_call.1} parent=31 // pred_check
          %p1240 = pneg %p127
        $region34: #{tpu_custom_call.1} parent=31 // pred_check_branch
          %1242 = sbr.rel (%p1240) target = $region36
        $region35: #{tpu_custom_call.1} parent=31 // pred_region
          %s1243 = smul.u32 64, %s22
          %s1245 = ssub.s32 4096, 4096
          %1246 = vsyncadd %s1236, %s1245
          %s1247 = sadd.s32 %s21, %s1243
          %s1248 = smul.addr %s1247, 64
          %s1249 = scalar_lea.hbm %s3, %s1248
          %s1250 = sshll.u32 %s1239, 4
          %s1251 = int_to_ptr.vmem [resolvable:$true] %s1250
          %1256 = dma.vmem_to_hbm [thread:$0]  %s1251, 4096, %s1249, %s1236, 64, 64, 4
        $region36: #{tpu_custom_call.1} parent=31 // pred_fallthru
          _
      $region32: #{tpu_custom_call.1} parent=5 // pred_fallthru
        _
      %p1257 = scmp.le.s32.totalorder 2, %s12
      // Predicated region
      $region37: #{tpu_custom_call.1} parent=5 // pred_check
        %p1258 = pneg %p1257
      $region38: #{tpu_custom_call.1} parent=5 // pred_check_branch
        %1260 = sbr.rel (%p1258) target = $region40
      $region39: #{tpu_custom_call.1} parent=5 // pred_region
        %s1261 = ssub.s32 %s12, 2
        // Predicated region
        $region41: #{tpu_custom_call.1} parent=39 // pred_check
          %p1262 = pneg %p133
        $region42: #{tpu_custom_call.1} parent=39 // pred_check_branch
          %1264 = sbr.rel (%p1262) target = $region44
        $region43: #{tpu_custom_call.1} parent=39 // pred_region
          %s1265 = sand.u32 %s118, 1
          %s1266 = scalar_lea.sflag [#allocation3], %s1265
          %s1267 = sand.u32 %s118, 1
          %s1268 = smul.addr %s1267, 256
          %s1269 = scalar_lea.vmem [#allocation2], %s1268
          %1270 = dma.done %s1266, 4096
        $region44: #{tpu_custom_call.1} parent=39 // pred_fallthru
          _
      $region40: #{tpu_custom_call.1} parent=5 // pred_fallthru
        _
    $region6: #{tpu_custom_call.1} parent=1 // loop_footer
      %s16 = sadd.s32 1, %s12
    $region7: #{tpu_custom_call.1} parent=1 // loop_footer_branch
      %11 = sbr.rel target = $region3
    $region8: #{tpu_custom_call.1} parent=1 // loop_exit
      _
    %1271 = vsyncpa [#allocation3], 1
    %s1272 = scalar_lea.sflag [#allocation3], 1
    %1273 = vsyncpa %s1272, 1

</llo_original>
